<compile_context>
chip_gen: v6e
topology: v6e:2x2x1
jax: 0.10.0
libtpu: 0.0.40
codegen_flags: <defaults>
</compile_context>

<pallas_src>
import functools

import jax
import jax.numpy as jnp
from jax.experimental import pallas as pl
from jax.experimental.pallas import tpu as pltpu


def _round_up(n, m):
    return ((n + m - 1) // m) * m


def _encoder_kernel(x_ref, w1_ref, b1_ref, w2_ref, b2_ref,
                    whead_ref, bhead_ref,
                    mask1_ref, mask2_ref, eps_ref,
                    out_ref, *, lpad):
    # fc1: Linear (bf16 operands on the MXU, f32 accumulation) + ReLU + dropout.
    # Masks are exact 0/1; the 1/keep_prob scale was folded into w2 at pack time.
    h1 = jnp.dot(x_ref[...], w1_ref[...],
                 preferred_element_type=jnp.float32) + b1_ref[...]
    h1 = jnp.maximum(h1, 0.0) * mask1_ref[...].astype(jnp.float32)

    # fc2 (fc2's dropout scale was folded into the head weights).
    h2 = jnp.dot(h1.astype(jnp.bfloat16), w2_ref[...],
                 preferred_element_type=jnp.float32) + b2_ref[...]
    h2 = jnp.maximum(h2, 0.0) * mask2_ref[...].astype(jnp.float32)

    # Fused, zero-padded [mu | logvar] head: one (H, 2*lpad) matmul.
    heads = jnp.dot(h2.astype(jnp.bfloat16), whead_ref[...],
                    preferred_element_type=jnp.float32) + bhead_ref[...]
    heads = jnp.maximum(heads, 0.0)        # reference ReLUs both mu and logvar

    # Lane-aligned slab store #1: [mu_pad | logvar_pad] (offset 0, width 2*lpad).
    out_ref[:, : 2 * lpad] = heads

    mu = heads[:, :lpad]                   # 128-aligned splits, no lane shuffles
    logvar = heads[:, lpad:]
    # Reparameterisation: z = mu + eps * exp(logvar / 2).
    z = mu + eps_ref[...] * jnp.exp(logvar * 0.5)

    # Lane-aligned slab store #2: z_pad (offset 2*lpad, width lpad).
    out_ref[:, 2 * lpad:] = z


def pack_params(params, dropout_rate):
    """One-time packing:
      * mu/logvar heads fused into one (H, 2*lpad) linear; each half zero-padded
        from L to lpad = round_up(L, 128) lanes.  Padding columns MUST be zero so
        the padded logvar lanes stay 0 (exp(0)=1 never leaks into valid lanes).
      * training-mode dropout scale 1/keep folded into the *downstream* weights
        (fc1's scale into w2, fc2's scale into the head) so masks are exact 0/1.
      * matmul operands stored as bf16; biases stay f32 (added to the f32 acc).
    """
    keep = 1.0 - dropout_rate
    inv_keep = 1.0 / keep
    L = params["wmu"].shape[1]
    lpad = _round_up(L, 128)

    def pad_cols(a):
        return jnp.pad(a, ((0, 0), (0, lpad - L)))

    whead = jnp.concatenate(
        [pad_cols(params["wmu"] * inv_keep), pad_cols(params["wlv"] * inv_keep)],
        axis=1)                                             # (H, 2*lpad)
    bhead = jnp.concatenate(
        [pad_cols(params["bmu"]), pad_cols(params["blv"])], axis=1)  # (1, 2*lpad)

    return dict(
        w1=params["w1"].astype(jnp.bfloat16),
        b1=params["b1"].astype(jnp.float32),
        w2=(params["w2"] * inv_keep).astype(jnp.bfloat16),
        b2=params["b2"].astype(jnp.float32),
        whead=whead.astype(jnp.bfloat16),
        bhead=bhead.astype(jnp.float32),
        latent_dim=L,
        latent_pad=lpad,
    )


def _pick_batch_tile(B, stream_bytes_per_row, resident_bytes,
                     vmem_budget=24 << 20, max_tile=1024):
    """Largest multiple-of-8 tile that divides B (no partial blocks), fits a
    conservative VMEM budget (streaming tiles are double-buffered, resident
    weights counted twice to be safe), and leaves >= 2 grid steps so both v7x
    TensorCores get work under dimension_semantics=("parallel",)."""
    if B <= 8 or B % 8 != 0:
        return B  # single full-batch step: block == full array, always legal
    budget_rows = (vmem_budget - 2 * resident_bytes) // max(1, 2 * stream_bytes_per_row)
    cap = min(max_tile, max(8, budget_rows), B // 2)
    cap = max(8, (cap // 8) * 8)
    best = 8
    for t in range(8, cap + 1, 8):
        if B % t == 0:
            best = t
    return best


def encoder_forward(x, packed, mask1, mask2, eps, *, batch_tile=None):
    """Whole encoder forward in one Pallas invocation (1-D grid over batch rows).

    x:       (B, input_dim)  (cast to bf16 internally)
    packed:  output of pack_params()
    mask1/2: (B, H) dropout KEEP masks with values exactly 0/1 (NOT pre-scaled)
    eps:     (B, L) standard-normal reparameterisation noise
    Returns (z, mu, logvar), each (B, L) float32.
    """
    B, din = x.shape
    H = packed["w1"].shape[1]
    L = packed["latent_dim"]
    lpad = packed["latent_pad"]

    x = x.astype(jnp.bfloat16)
    mask1 = mask1.astype(jnp.bfloat16)     # exact: values are 0 or 1
    mask2 = mask2.astype(jnp.bfloat16)
    eps = eps.astype(jnp.float32)
    if lpad != L:
        eps = jnp.pad(eps, ((0, 0), (0, lpad - L)))   # zero pad -> padded z lanes stay 0

    weight_keys = ("w1", "b1", "w2", "b2", "whead", "bhead")
    resident_bytes = sum(int(packed[k].nbytes) for k in weight_keys)
    # streaming bytes per batch row: x + 2 masks (bf16) + eps + packed output (f32)
    stream_bytes_per_row = 2 * din + 2 * 2 * H + 4 * lpad + 4 * 3 * lpad

    if batch_tile is None:
        batch_tile = _pick_batch_tile(B, stream_bytes_per_row, resident_bytes)
    tb = batch_tile
    grid = (pl.cdiv(B, tb),)

    def row_spec(width):
        return pl.BlockSpec((tb, width), lambda i: (i, 0))

    def resident_spec(shape):
        # Constant block index -> weight/bias stays VMEM-resident across steps.
        return pl.BlockSpec(shape, lambda i: (0, 0))

    in_specs = [
        row_spec(din),                          # x        (B, din)     bf16
        resident_spec(packed["w1"].shape),      # w1       (din, H)     bf16
        resident_spec(packed["b1"].shape),      # b1       (1, H)       f32
        resident_spec(packed["w2"].shape),      # w2       (H, H)       bf16
        resident_spec(packed["b2"].shape),      # b2       (1, H)       f32
        resident_spec(packed["whead"].shape),   # whead    (H, 2*lpad)  bf16
        resident_spec(packed["bhead"].shape),   # bhead    (1, 2*lpad)  f32
        row_spec(H),                            # mask1    (B, H)       bf16
        row_spec(H),                            # mask2    (B, H)       bf16
        row_spec(lpad),                         # eps      (B, lpad)    f32
    ]
    out_spec = pl.BlockSpec((tb, 3 * lpad), lambda i: (i, 0))

    cost = pl.CostEstimate(
        flops=2 * B * (din * H + H * H + H * 2 * lpad),
        transcendentals=B * lpad,
        bytes_accessed=int(x.nbytes + mask1.nbytes + mask2.nbytes + eps.nbytes
                           + resident_bytes + B * 3 * lpad * 4),
    )

    kernel = functools.partial(_encoder_kernel, lpad=lpad)
    out = pl.pallas_call(
        kernel,
        out_shape=jax.ShapeDtypeStruct((B, 3 * lpad), jnp.float32),
        grid=grid,
        in_specs=in_specs,
        out_specs=out_spec,
        compiler_params=pltpu.CompilerParams(
            dimension_semantics=("parallel",)),
        cost_estimate=cost,
    )(x, packed["w1"], packed["b1"], packed["w2"], packed["b2"],
      packed["whead"], packed["bhead"], mask1, mask2, eps)

    mu = out[:, :L]
    logvar = out[:, lpad:lpad + L]
    z = out[:, 2 * lpad:2 * lpad + L]
    return z, mu, logvar


def init_params(key, input_dim, hidden_dim, latent_dim):
    """Deterministic parameter init (uniform +-1/sqrt(fan_in), like nn.Linear)."""
    def linear(k, fan_in, fan_out):
        kw, kb = jax.random.split(k)
        bound = 1.0 / jnp.sqrt(fan_in)
        w = jax.random.uniform(kw, (fan_in, fan_out), jnp.float32, -bound, bound)
        b = jax.random.uniform(kb, (1, fan_out), jnp.float32, -bound, bound)
        return w, b

    k1, k2, k3, k4 = jax.random.split(key, 4)
    w1, b1 = linear(k1, input_dim, hidden_dim)
    w2, b2 = linear(k2, hidden_dim, hidden_dim)
    wmu, bmu = linear(k3, hidden_dim, latent_dim)
    wlv, blv = linear(k4, hidden_dim, latent_dim)
    return dict(w1=w1, b1=b1, w2=w2, b2=b2,
                wmu=wmu, bmu=bmu, wlv=wlv, blv=blv)


if __name__ == "__main__":
    B, INPUT_DIM, HIDDEN_DIM, LATENT_DIM = 16, 32, 32, 16
    DROPOUT_RATE = 0.1

    root = jax.random.PRNGKey(0)
    k_params, k_x, k_m1, k_m2, k_eps = jax.random.split(root, 5)

    params = init_params(k_params, INPUT_DIM, HIDDEN_DIM, LATENT_DIM)
    packed = pack_params(params, DROPOUT_RATE)
    x = jax.random.normal(k_x, (B, INPUT_DIM), jnp.float32)

    keep_prob = 1.0 - DROPOUT_RATE
    mask1 = jax.random.bernoulli(k_m1, keep_prob, (B, HIDDEN_DIM)).astype(jnp.float32)
    mask2 = jax.random.bernoulli(k_m2, keep_prob, (B, HIDDEN_DIM)).astype(jnp.float32)
    eps = jax.random.normal(k_eps, (B, LATENT_DIM), jnp.float32)

    z, mu, logvar = encoder_forward(x, packed, mask1, mask2, eps)
    jax.block_until_ready((z, mu, logvar))

    # Pure-JAX reference: same math / same randoms, f32 activations, weights
    # quantised to bf16 exactly as the kernel's MXU operands are.  Remaining
    # differences come from the kernel's bf16 activation casts and the folded
    # dropout scale being quantised with the weights, hence the tolerances.
    q = lambda w: w.astype(jnp.bfloat16).astype(jnp.float32)
    s = 1.0 / keep_prob
    h1 = jnp.maximum(x @ q(params["w1"]) + params["b1"], 0.0) * mask1 * s
    h2 = jnp.maximum(h1 @ q(params["w2"]) + params["b2"], 0.0) * mask2 * s
    mu_ref = jnp.maximum(h2 @ q(params["wmu"]) + params["bmu"], 0.0)
    lv_ref = jnp.maximum(h2 @ q(params["wlv"]) + params["blv"], 0.0)
    z_ref = mu_ref + eps * jnp.exp(lv_ref / 2.0)

    assert jnp.allclose(mu, mu_ref, atol=5e-2, rtol=5e-2), "mu mismatch"
    assert jnp.allclose(logvar, lv_ref, atol=5e-2, rtol=5e-2), "logvar mismatch"
    assert jnp.allclose(z, z_ref, atol=1e-1, rtol=5e-2), "z mismatch"

    print("KERNEL_OK")
</pallas_src>

<mosaic_0001>
module attributes {stable_mosaic.version = 11 : i64} {
  func.func @_encoder_kernel(%arg0: i32, %arg1: memref<8x32xbf16, #tpu.memory_space<vmem>>, %arg2: memref<32x32xbf16, #tpu.memory_space<vmem>>, %arg3: memref<1x32xf32, #tpu.memory_space<vmem>>, %arg4: memref<32x32xbf16, #tpu.memory_space<vmem>>, %arg5: memref<1x32xf32, #tpu.memory_space<vmem>>, %arg6: memref<32x256xbf16, #tpu.memory_space<vmem>>, %arg7: memref<1x256xf32, #tpu.memory_space<vmem>>, %arg8: memref<8x32xbf16, #tpu.memory_space<vmem>>, %arg9: memref<8x32xbf16, #tpu.memory_space<vmem>>, %arg10: memref<8x128xf32, #tpu.memory_space<vmem>>, %arg11: memref<8x384xf32, #tpu.memory_space<vmem>>) attributes {dimension_semantics = [#tpu.dimension_semantics<parallel>], iteration_bounds = array<i64: 2>, scalar_prefetch = 0 : i64, scratch_operands = 0 : i64, tpu.core_type = #tpu.core_type<tc>, window_params = [{transform_indices = @transform_0, window_bounds = array<i64: 8, 32>}, {pipeline_mode = #tpu.pipeline_mode<synchronous>, transform_indices = @transform_1, window_bounds = array<i64: 32, 32>}, {pipeline_mode = #tpu.pipeline_mode<synchronous>, transform_indices = @transform_2, window_bounds = array<i64: 1, 32>}, {pipeline_mode = #tpu.pipeline_mode<synchronous>, transform_indices = @transform_3, window_bounds = array<i64: 32, 32>}, {pipeline_mode = #tpu.pipeline_mode<synchronous>, transform_indices = @transform_4, window_bounds = array<i64: 1, 32>}, {pipeline_mode = #tpu.pipeline_mode<synchronous>, transform_indices = @transform_5, window_bounds = array<i64: 32, 256>}, {pipeline_mode = #tpu.pipeline_mode<synchronous>, transform_indices = @transform_6, window_bounds = array<i64: 1, 256>}, {transform_indices = @transform_7, window_bounds = array<i64: 8, 32>}, {transform_indices = @transform_8, window_bounds = array<i64: 8, 32>}, {transform_indices = @transform_9, window_bounds = array<i64: 8, 128>}, {transform_indices = @transform_10, window_bounds = array<i64: 8, 384>}]} {
    %c0 = arith.constant 0 : index
    %c0_0 = arith.constant 0 : index
    %0 = vector.load %arg1[%c0, %c0_0] : memref<8x32xbf16, #tpu.memory_space<vmem>>, vector<8x32xbf16>
    %c0_1 = arith.constant 0 : index
    %c0_2 = arith.constant 0 : index
    %1 = vector.load %arg2[%c0_1, %c0_2] : memref<32x32xbf16, #tpu.memory_space<vmem>>, vector<32x32xbf16>
    %cst = arith.constant dense<0.000000e+00> : vector<8x32xf32>
    %2 = tpu.matmul %0, %1, %cst {dimension_numbers = #tpu.dot_dimension_numbers<[1], [0], [0], [1], [0, 0, 1, 1], [], []>} : vector<8x32xbf16>, vector<32x32xbf16>, vector<8x32xf32> -> vector<8x32xf32>
    %c0_3 = arith.constant 0 : index
    %c0_4 = arith.constant 0 : index
    %3 = vector.load %arg3[%c0_3, %c0_4] : memref<1x32xf32, #tpu.memory_space<vmem>>, vector<1x32xf32>
    %4 = vector.broadcast %3 : vector<1x32xf32> to vector<8x32xf32>
    %5 = arith.addf %2, %4 : vector<8x32xf32>
    %cst_5 = arith.constant 0.000000e+00 : f32
    %6 = vector.broadcast %cst_5 : f32 to vector<8x32xf32>
    %7 = arith.maximumf %5, %6 : vector<8x32xf32>
    %c0_6 = arith.constant 0 : index
    %c0_7 = arith.constant 0 : index
    %8 = vector.load %arg8[%c0_6, %c0_7] : memref<8x32xbf16, #tpu.memory_space<vmem>>, vector<8x32xbf16>
    %9 = arith.extf %8 : vector<8x32xbf16> to vector<8x32xf32>
    %10 = arith.mulf %7, %9 : vector<8x32xf32>
    %11 = arith.truncf %10 : vector<8x32xf32> to vector<8x32xbf16>
    %c0_8 = arith.constant 0 : index
    %c0_9 = arith.constant 0 : index
    %12 = vector.load %arg4[%c0_8, %c0_9] : memref<32x32xbf16, #tpu.memory_space<vmem>>, vector<32x32xbf16>
    %cst_10 = arith.constant dense<0.000000e+00> : vector<8x32xf32>
    %13 = tpu.matmul %11, %12, %cst_10 {dimension_numbers = #tpu.dot_dimension_numbers<[1], [0], [0], [1], [0, 0, 1, 1], [], []>} : vector<8x32xbf16>, vector<32x32xbf16>, vector<8x32xf32> -> vector<8x32xf32>
    %c0_11 = arith.constant 0 : index
    %c0_12 = arith.constant 0 : index
    %14 = vector.load %arg5[%c0_11, %c0_12] : memref<1x32xf32, #tpu.memory_space<vmem>>, vector<1x32xf32>
    %15 = vector.broadcast %14 : vector<1x32xf32> to vector<8x32xf32>
    %16 = arith.addf %13, %15 : vector<8x32xf32>
    %cst_13 = arith.constant 0.000000e+00 : f32
    %17 = vector.broadcast %cst_13 : f32 to vector<8x32xf32>
    %18 = arith.maximumf %16, %17 : vector<8x32xf32>
    %c0_14 = arith.constant 0 : index
    %c0_15 = arith.constant 0 : index
    %19 = vector.load %arg9[%c0_14, %c0_15] : memref<8x32xbf16, #tpu.memory_space<vmem>>, vector<8x32xbf16>
    %20 = arith.extf %19 : vector<8x32xbf16> to vector<8x32xf32>
    %21 = arith.mulf %18, %20 : vector<8x32xf32>
    %22 = arith.truncf %21 : vector<8x32xf32> to vector<8x32xbf16>
    %c0_16 = arith.constant 0 : index
    %c0_17 = arith.constant 0 : index
    %23 = vector.load %arg6[%c0_16, %c0_17] : memref<32x256xbf16, #tpu.memory_space<vmem>>, vector<32x256xbf16>
    %cst_18 = arith.constant dense<0.000000e+00> : vector<8x256xf32>
    %24 = tpu.matmul %22, %23, %cst_18 {dimension_numbers = #tpu.dot_dimension_numbers<[1], [0], [0], [1], [0, 0, 1, 1], [], []>} : vector<8x32xbf16>, vector<32x256xbf16>, vector<8x256xf32> -> vector<8x256xf32>
    %c0_19 = arith.constant 0 : index
    %c0_20 = arith.constant 0 : index
    %25 = vector.load %arg7[%c0_19, %c0_20] : memref<1x256xf32, #tpu.memory_space<vmem>>, vector<1x256xf32>
    %26 = vector.broadcast %25 : vector<1x256xf32> to vector<8x256xf32>
    %27 = arith.addf %24, %26 : vector<8x256xf32>
    %cst_21 = arith.constant 0.000000e+00 : f32
    %28 = vector.broadcast %cst_21 : f32 to vector<8x256xf32>
    %29 = arith.maximumf %27, %28 : vector<8x256xf32>
    %c0_22 = arith.constant 0 : index
    %c0_23 = arith.constant 0 : index
    %30 = vector.load %arg11[%c0_22, %c0_23] : memref<8x384xf32, #tpu.memory_space<vmem>>, vector<8x256xf32>
    tpu.vector_store %arg11[%c0_22, %c0_23], %29 {strides = array<i32>} : memref<8x384xf32, #tpu.memory_space<vmem>>, vector<8x256xf32>,
    %31 = vector.extract_strided_slice %29 {offsets = [0, 0], sizes = [8, 128], strides = [1, 1]} : vector<8x256xf32> to vector<8x128xf32>
    %32 = vector.extract_strided_slice %29 {offsets = [0, 128], sizes = [8, 128], strides = [1, 1]} : vector<8x256xf32> to vector<8x128xf32>
    %c0_24 = arith.constant 0 : index
    %c0_25 = arith.constant 0 : index
    %33 = vector.load %arg10[%c0_24, %c0_25] : memref<8x128xf32, #tpu.memory_space<vmem>>, vector<8x128xf32>
    %cst_26 = arith.constant 5.000000e-01 : f32
    %34 = vector.broadcast %cst_26 : f32 to vector<8x128xf32>
    %35 = arith.mulf %32, %34 : vector<8x128xf32>
    %36 = math.exp %35 : vector<8x128xf32>
    %37 = arith.mulf %33, %36 : vector<8x128xf32>
    %38 = arith.addf %31, %37 : vector<8x128xf32>
    %c0_27 = arith.constant 0 : index
    %c256 = arith.constant 256 : index
    %39 = vector.load %arg11[%c0_27, %c256] : memref<8x384xf32, #tpu.memory_space<vmem>>, vector<8x128xf32>
    tpu.vector_store %arg11[%c0_27, %c256], %38 {strides = array<i32>} : memref<8x384xf32, #tpu.memory_space<vmem>>, vector<8x128xf32>,
    return
  }
  func.func @transform_0(%arg0: i32) -> (i32, i32) {
    %c0_i32 = arith.constant 0 : i32
    %c0_i32_0 = arith.constant 0 : i32
    return %arg0, %c0_i32 : i32, i32
  }
  func.func @transform_1(%arg0: i32) -> (i32, i32) {
    %c0_i32 = arith.constant 0 : i32
    %c0_i32_0 = arith.constant 0 : i32
    %c0_i32_1 = arith.constant 0 : i32
    return %c0_i32, %c0_i32_0 : i32, i32
  }
  func.func @transform_2(%arg0: i32) -> (i32, i32) {
    %c0_i32 = arith.constant 0 : i32
    %c0_i32_0 = arith.constant 0 : i32
    %c0_i32_1 = arith.constant 0 : i32
    return %c0_i32, %c0_i32_0 : i32, i32
  }
  func.func @transform_3(%arg0: i32) -> (i32, i32) {
    %c0_i32 = arith.constant 0 : i32
    %c0_i32_0 = arith.constant 0 : i32
    %c0_i32_1 = arith.constant 0 : i32
    return %c0_i32, %c0_i32_0 : i32, i32
  }
  func.func @transform_4(%arg0: i32) -> (i32, i32) {
    %c0_i32 = arith.constant 0 : i32
    %c0_i32_0 = arith.constant 0 : i32
    %c0_i32_1 = arith.constant 0 : i32
    return %c0_i32, %c0_i32_0 : i32, i32
  }
  func.func @transform_5(%arg0: i32) -> (i32, i32) {
    %c0_i32 = arith.constant 0 : i32
    %c0_i32_0 = arith.constant 0 : i32
    %c0_i32_1 = arith.constant 0 : i32
    return %c0_i32, %c0_i32_0 : i32, i32
  }
  func.func @transform_6(%arg0: i32) -> (i32, i32) {
    %c0_i32 = arith.constant 0 : i32
    %c0_i32_0 = arith.constant 0 : i32
    %c0_i32_1 = arith.constant 0 : i32
    return %c0_i32, %c0_i32_0 : i32, i32
  }
  func.func @transform_7(%arg0: i32) -> (i32, i32) {
    %c0_i32 = arith.constant 0 : i32
    %c0_i32_0 = arith.constant 0 : i32
    return %arg0, %c0_i32 : i32, i32
  }
  func.func @transform_8(%arg0: i32) -> (i32, i32) {
    %c0_i32 = arith.constant 0 : i32
    %c0_i32_0 = arith.constant 0 : i32
    return %arg0, %c0_i32 : i32, i32
  }
  func.func @transform_9(%arg0: i32) -> (i32, i32) {
    %c0_i32 = arith.constant 0 : i32
    %c0_i32_0 = arith.constant 0 : i32
    return %arg0, %c0_i32 : i32, i32
  }
  func.func @transform_10(%arg0: i32) -> (i32, i32) {
    %c0_i32 = arith.constant 0 : i32
    %c0_i32_0 = arith.constant 0 : i32
    return %arg0, %c0_i32 : i32, i32
  }
}

</mosaic_0001>

<llo_original>
// kernel: tpu_custom_call.1
$region0: #{tpu_custom_call.1}
  #allocation0 [shape = 'u32[]', space=smem, size = 0x4, offset = 0x4, fixed_abs, tag = 'smem constant byte address 0x4 - core index']
  #allocation1 [shape = 'u32[144,128]{1,0:T(1,128)}', space=vmem, size = 0x12000, scoped, tag = 'internal scratch']
  %s0 = inlined_call_operand.hbm [shape: bf16[16,32], index: 0, kind: input, shape index: {}]
  %s1 = inlined_call_operand.hbm [shape: bf16[32,32], index: 1, kind: input, shape index: {}]
  %s2 = inlined_call_operand.hbm [shape: f32[1,32], index: 2, kind: input, shape index: {}]
  %s3 = inlined_call_operand.hbm [shape: bf16[32,32], index: 3, kind: input, shape index: {}]
  %s4 = inlined_call_operand.hbm [shape: f32[1,32], index: 4, kind: input, shape index: {}]
  %s5 = inlined_call_operand.hbm [shape: bf16[32,256], index: 5, kind: input, shape index: {}]
  %s6 = inlined_call_operand.hbm [shape: f32[1,256], index: 6, kind: input, shape index: {}]
  %s7 = inlined_call_operand.hbm [shape: bf16[16,32], index: 7, kind: input, shape index: {}]
  %s8 = inlined_call_operand.hbm [shape: bf16[16,32], index: 8, kind: input, shape index: {}]
  %s9 = inlined_call_operand.vmem [shape: f32[16,128], index: 9, kind: input, shape index: {}]
  %s10 = inlined_call_operand.hbm [shape: f32[16,384], index: 10, kind: output, shape index: {}]
  %s11 = sld [smem:[#allocation0]]
  $region109: #{tpu_custom_call.1} parent=0
    _
  %s13 = ssub.s32 1, %s11
  %s14 = scalar_select 0, %s13, %s11
  $region1: #{tpu_custom_call.1} parent=0
    #allocation2 [shape = 'u8[4096]{0}', space=vmem, size = 0x1000, scoped, tag = 'input window, operand 0']
    #allocation3 [shape = 's32[2]{0}', space=sflag, size = 0x8, scoped, tag = 'scoped memory for tpu_custom_call.1']
    #allocation4 [shape = 's32[2]{0}', space=sflag, size = 0x8, scoped, tag = 'scoped memory for tpu_custom_call.1']
    #allocation5 [shape = 'u8[8192]{0}', space=vmem, size = 0x2000, scoped, tag = 'input window, operand 1, single buffered']
    #allocation6 [shape = 's32[1]{0}', space=sflag, size = 0x4, scoped, tag = 'scoped memory for tpu_custom_call.1']
    #allocation7 [shape = 'u8[512]{0}', space=vmem, size = 0x400, scoped, tag = 'input window, operand 2, single buffered']
    #allocation8 [shape = 'u8[8192]{0}', space=vmem, size = 0x2000, scoped, tag = 'input window, operand 3, single buffered']
    #allocation9 [shape = 's32[1]{0}', space=sflag, size = 0x4, scoped, tag = 'scoped memory for tpu_custom_call.1']
    #allocation10 [shape = 'u8[512]{0}', space=vmem, size = 0x400, scoped, tag = 'input window, operand 4, single buffered']
    #allocation11 [shape = 'u8[16384]{0}', space=vmem, size = 0x4000, scoped, tag = 'input window, operand 5, single buffered']
    #allocation12 [shape = 's32[1]{0}', space=sflag, size = 0x4, scoped, tag = 'scoped memory for tpu_custom_call.1']
    #allocation13 [shape = 'u8[1024]{0}', space=vmem, size = 0x400, scoped, tag = 'input window, operand 6, single buffered']
    #allocation14 [shape = 'u8[4096]{0}', space=vmem, size = 0x1000, scoped, tag = 'input window, operand 7']
    #allocation15 [shape = 's32[2]{0}', space=sflag, size = 0x8, scoped, tag = 'scoped memory for tpu_custom_call.1']
    #allocation16 [shape = 'u8[4096]{0}', space=vmem, size = 0x1000, scoped, tag = 'input window, operand 8']
    #allocation17 [shape = 'u8[24576]{0}', space=vmem, size = 0x6000, scoped, tag = 'output window, operand 0']
    %15 = vsyncpa [#allocation3], 0
    %s16 = scalar_lea.sflag [#allocation3], 1
    %17 = vsyncpa %s16, 0
    %18 = vsyncpa [#allocation6], 0
    %19 = vsyncpa [#allocation9], 0
    %20 = vsyncpa [#allocation12], 0
    %21 = vsyncpa [#allocation15], 0
    %s22 = scalar_lea.sflag [#allocation15], 1
    %23 = vsyncpa %s22, 0
    %24 = vsyncpa [#allocation4], 0
    %s25 = scalar_lea.sflag [#allocation4], 1
    %26 = vsyncpa %s25, 0
    loop: start=0, step=1, limit=4
    $region2: #{tpu_custom_call.1} parent=1 // loop_pre_header
      _
    $region3: #{tpu_custom_call.1} parent=1 // loop_header
      %s28 = sphi 0, %s32
      %p29 = scmp.ge.s32.totalorder %s28, 4
      %s38 = sphi 0, %s40
      %s41 = sphi 0, %s38
      %s42 = sphi 0, %s41
      %s58 = sphi 0, %s42
      %s62 = sphi 0, %s62
      %s64 = sphi 0, %s62
      %s65 = sphi 0, %s64
      %s79 = sphi 0, %s65
      %s83 = sphi 0, %s83
      %s85 = sphi 0, %s83
      %s86 = sphi 0, %s85
      %s100 = sphi 0, %s86
      %s104 = sphi 0, %s104
      %s106 = sphi 0, %s104
      %s107 = sphi 0, %s106
      %s121 = sphi 0, %s107
      %s125 = sphi 0, %s125
      %s127 = sphi 0, %s125
      %s128 = sphi 0, %s127
      %s142 = sphi 0, %s128
      %s146 = sphi 0, %s146
      %s148 = sphi 0, %s146
      %s149 = sphi 0, %s148
      %s163 = sphi 0, %s149
      %s167 = sphi 0, %s167
      %s169 = sphi 0, %s167
      %s170 = sphi 0, %s169
      %s184 = sphi 0, %s170
      %s190 = sphi 0, %s192
      %s193 = sphi 0, %s190
      %s194 = sphi 0, %s193
      %s210 = sphi 0, %s194
      %s216 = sphi 0, %s218
      %s219 = sphi 0, %s216
      %s220 = sphi 0, %s219
      %s236 = sphi 0, %s220
      %s242 = sphi 0, %s244
      %s245 = sphi 0, %s242
      %s246 = sphi 0, %s245
      %s262 = sphi 0, %s246
      %s268 = sphi 0, %s270
      %s271 = sphi 0, %s268
      %s272 = sphi 0, %s271
      %s288 = sphi 0, %s272
    $region4: #{tpu_custom_call.1} parent=1 // loop_header_branch
      %31 = sbr.rel (%p29) target = $region8
    $region5: #{tpu_custom_call.1} parent=1 // loop_body
      %s33 = ssub.s32 %s28, 1
      %s34 = ssub.s32 %s28, 2
      %s35 = sadd.s32 %s28, 1
      %s36 = ssub.s32 %s28, %s35
      %p37 = scmp.eq.s32.totalorder %s36, 0
      %s39 = sadd.s32 %s38, 1
      %s40 = scalar_select %p37, %s38, %s39
      %p43 = pneg %p37
      %p44 = scmp.eq.s32.totalorder %s28, 1
      %p45 = por %p43, %p44
      %p46 = scmp.ne.s32.totalorder %s38, %s41
      %p47 = scmp.eq.s32.totalorder %s28, 0
      %p48 = por %p46, %p47
      %p49 = scmp.ne.s32.totalorder %s38, %s41
      %p50 = scmp.eq.s32.totalorder %s33, 1
      %p51 = por %p49, %p50
      %p52 = scmp.ne.s32.totalorder %s41, %s42
      %p53 = scmp.eq.s32.totalorder %s33, 0
      %p54 = por %p52, %p53
      %p55 = scmp.ne.s32.totalorder %s41, %s42
      %p56 = scmp.eq.s32.totalorder %s34, 1
      %p57 = por %p55, %p56
      %p59 = scmp.ne.s32.totalorder %s42, %s58
      %p60 = scmp.eq.s32.totalorder %s34, 0
      %p61 = por %p59, %p60
      %s63 = sadd.s32 %s62, 1
      %p66 = scmp.eq.s32.totalorder %s28, 1
      %p67 = scmp.ne.s32.totalorder %s62, %s64
      %p68 = scmp.eq.s32.totalorder %s28, 0
      %p69 = por %p67, %p68
      %p70 = scmp.ne.s32.totalorder %s62, %s64
      %p71 = scmp.eq.s32.totalorder %s33, 1
      %p72 = por %p70, %p71
      %p73 = scmp.ne.s32.totalorder %s64, %s65
      %p74 = scmp.eq.s32.totalorder %s33, 0
      %p75 = por %p73, %p74
      %p76 = scmp.ne.s32.totalorder %s64, %s65
      %p77 = scmp.eq.s32.totalorder %s34, 1
      %p78 = por %p76, %p77
      %p80 = scmp.ne.s32.totalorder %s65, %s79
      %p81 = scmp.eq.s32.totalorder %s34, 0
      %p82 = por %p80, %p81
      %s84 = sadd.s32 %s83, 1
      %p87 = scmp.eq.s32.totalorder %s28, 1
      %p88 = scmp.ne.s32.totalorder %s83, %s85
      %p89 = scmp.eq.s32.totalorder %s28, 0
      %p90 = por %p88, %p89
      %p91 = scmp.ne.s32.totalorder %s83, %s85
      %p92 = scmp.eq.s32.totalorder %s33, 1
      %p93 = por %p91, %p92
      %p94 = scmp.ne.s32.totalorder %s85, %s86
      %p95 = scmp.eq.s32.totalorder %s33, 0
      %p96 = por %p94, %p95
      %p97 = scmp.ne.s32.totalorder %s85, %s86
      %p98 = scmp.eq.s32.totalorder %s34, 1
      %p99 = por %p97, %p98
      %p101 = scmp.ne.s32.totalorder %s86, %s100
      %p102 = scmp.eq.s32.totalorder %s34, 0
      %p103 = por %p101, %p102
      %s105 = sadd.s32 %s104, 1
      %p108 = scmp.eq.s32.totalorder %s28, 1
      %p109 = scmp.ne.s32.totalorder %s104, %s106
      %p110 = scmp.eq.s32.totalorder %s28, 0
      %p111 = por %p109, %p110
      %p112 = scmp.ne.s32.totalorder %s104, %s106
      %p113 = scmp.eq.s32.totalorder %s33, 1
      %p114 = por %p112, %p113
      %p115 = scmp.ne.s32.totalorder %s106, %s107
      %p116 = scmp.eq.s32.totalorder %s33, 0
      %p117 = por %p115, %p116
      %p118 = scmp.ne.s32.totalorder %s106, %s107
      %p119 = scmp.eq.s32.totalorder %s34, 1
      %p120 = por %p118, %p119
      %p122 = scmp.ne.s32.totalorder %s107, %s121
      %p123 = scmp.eq.s32.totalorder %s34, 0
      %p124 = por %p122, %p123
      %s126 = sadd.s32 %s125, 1
      %p129 = scmp.eq.s32.totalorder %s28, 1
      %p130 = scmp.ne.s32.totalorder %s125, %s127
      %p131 = scmp.eq.s32.totalorder %s28, 0
      %p132 = por %p130, %p131
      %p133 = scmp.ne.s32.totalorder %s125, %s127
      %p134 = scmp.eq.s32.totalorder %s33, 1
      %p135 = por %p133, %p134
      %p136 = scmp.ne.s32.totalorder %s127, %s128
      %p137 = scmp.eq.s32.totalorder %s33, 0
      %p138 = por %p136, %p137
      %p139 = scmp.ne.s32.totalorder %s127, %s128
      %p140 = scmp.eq.s32.totalorder %s34, 1
      %p141 = por %p139, %p140
      %p143 = scmp.ne.s32.totalorder %s128, %s142
      %p144 = scmp.eq.s32.totalorder %s34, 0
      %p145 = por %p143, %p144
      %s147 = sadd.s32 %s146, 1
      %p150 = scmp.eq.s32.totalorder %s28, 1
      %p151 = scmp.ne.s32.totalorder %s146, %s148
      %p152 = scmp.eq.s32.totalorder %s28, 0
      %p153 = por %p151, %p152
      %p154 = scmp.ne.s32.totalorder %s146, %s148
      %p155 = scmp.eq.s32.totalorder %s33, 1
      %p156 = por %p154, %p155
      %p157 = scmp.ne.s32.totalorder %s148, %s149
      %p158 = scmp.eq.s32.totalorder %s33, 0
      %p159 = por %p157, %p158
      %p160 = scmp.ne.s32.totalorder %s148, %s149
      %p161 = scmp.eq.s32.totalorder %s34, 1
      %p162 = por %p160, %p161
      %p164 = scmp.ne.s32.totalorder %s149, %s163
      %p165 = scmp.eq.s32.totalorder %s34, 0
      %p166 = por %p164, %p165
      %s168 = sadd.s32 %s167, 1
      %p171 = scmp.eq.s32.totalorder %s28, 1
      %p172 = scmp.ne.s32.totalorder %s167, %s169
      %p173 = scmp.eq.s32.totalorder %s28, 0
      %p174 = por %p172, %p173
      %p175 = scmp.ne.s32.totalorder %s167, %s169
      %p176 = scmp.eq.s32.totalorder %s33, 1
      %p177 = por %p175, %p176
      %p178 = scmp.ne.s32.totalorder %s169, %s170
      %p179 = scmp.eq.s32.totalorder %s33, 0
      %p180 = por %p178, %p179
      %p181 = scmp.ne.s32.totalorder %s169, %s170
      %p182 = scmp.eq.s32.totalorder %s34, 1
      %p183 = por %p181, %p182
      %p185 = scmp.ne.s32.totalorder %s170, %s184
      %p186 = scmp.eq.s32.totalorder %s34, 0
      %p187 = por %p185, %p186
      %s188 = ssub.s32 %s28, %s35
      %p189 = scmp.eq.s32.totalorder %s188, 0
      %s191 = sadd.s32 %s190, 1
      %s192 = scalar_select %p189, %s190, %s191
      %p195 = pneg %p189
      %p196 = scmp.eq.s32.totalorder %s28, 1
      %p197 = por %p195, %p196
      %p198 = scmp.ne.s32.totalorder %s190, %s193
      %p199 = scmp.eq.s32.totalorder %s28, 0
      %p200 = por %p198, %p199
      %p201 = scmp.ne.s32.totalorder %s190, %s193
      %p202 = scmp.eq.s32.totalorder %s33, 1
      %p203 = por %p201, %p202
      %p204 = scmp.ne.s32.totalorder %s193, %s194
      %p205 = scmp.eq.s32.totalorder %s33, 0
      %p206 = por %p204, %p205
      %p207 = scmp.ne.s32.totalorder %s193, %s194
      %p208 = scmp.eq.s32.totalorder %s34, 1
      %p209 = por %p207, %p208
      %p211 = scmp.ne.s32.totalorder %s194, %s210
      %p212 = scmp.eq.s32.totalorder %s34, 0
      %p213 = por %p211, %p212
      %s214 = ssub.s32 %s28, %s35
      %p215 = scmp.eq.s32.totalorder %s214, 0
      %s217 = sadd.s32 %s216, 1
      %s218 = scalar_select %p215, %s216, %s217
      %p221 = pneg %p215
      %p222 = scmp.eq.s32.totalorder %s28, 1
      %p223 = por %p221, %p222
      %p224 = scmp.ne.s32.totalorder %s216, %s219
      %p225 = scmp.eq.s32.totalorder %s28, 0
      %p226 = por %p224, %p225
      %p227 = scmp.ne.s32.totalorder %s216, %s219
      %p228 = scmp.eq.s32.totalorder %s33, 1
      %p229 = por %p227, %p228
      %p230 = scmp.ne.s32.totalorder %s219, %s220
      %p231 = scmp.eq.s32.totalorder %s33, 0
      %p232 = por %p230, %p231
      %p233 = scmp.ne.s32.totalorder %s219, %s220
      %p234 = scmp.eq.s32.totalorder %s34, 1
      %p235 = por %p233, %p234
      %p237 = scmp.ne.s32.totalorder %s220, %s236
      %p238 = scmp.eq.s32.totalorder %s34, 0
      %p239 = por %p237, %p238
      %s240 = ssub.s32 %s28, %s35
      %p241 = scmp.eq.s32.totalorder %s240, 0
      %s243 = sadd.s32 %s242, 1
      %s244 = scalar_select %p241, %s242, %s243
      %p247 = pneg %p241
      %p248 = scmp.eq.s32.totalorder %s28, 1
      %p249 = por %p247, %p248
      %p250 = scmp.ne.s32.totalorder %s242, %s245
      %p251 = scmp.eq.s32.totalorder %s28, 0
      %p252 = por %p250, %p251
      %p253 = scmp.ne.s32.totalorder %s242, %s245
      %p254 = scmp.eq.s32.totalorder %s33, 1
      %p255 = por %p253, %p254
      %p256 = scmp.ne.s32.totalorder %s245, %s246
      %p257 = scmp.eq.s32.totalorder %s33, 0
      %p258 = por %p256, %p257
      %p259 = scmp.ne.s32.totalorder %s245, %s246
      %p260 = scmp.eq.s32.totalorder %s34, 1
      %p261 = por %p259, %p260
      %p263 = scmp.ne.s32.totalorder %s246, %s262
      %p264 = scmp.eq.s32.totalorder %s34, 0
      %p265 = por %p263, %p264
      %s266 = ssub.s32 %s28, %s35
      %p267 = scmp.eq.s32.totalorder %s266, 0
      %s269 = sadd.s32 %s268, 1
      %s270 = scalar_select %p267, %s268, %s269
      %p273 = pneg %p267
      %p274 = scmp.eq.s32.totalorder %s28, 1
      %p275 = por %p273, %p274
      %p276 = scmp.ne.s32.totalorder %s268, %s271
      %p277 = scmp.eq.s32.totalorder %s28, 0
      %p278 = por %p276, %p277
      %p279 = scmp.ne.s32.totalorder %s268, %s271
      %p280 = scmp.eq.s32.totalorder %s33, 1
      %p281 = por %p279, %p280
      %p282 = scmp.ne.s32.totalorder %s271, %s272
      %p283 = scmp.eq.s32.totalorder %s33, 0
      %p284 = por %p282, %p283
      %p285 = scmp.ne.s32.totalorder %s271, %s272
      %p286 = scmp.eq.s32.totalorder %s34, 1
      %p287 = por %p285, %p286
      %p289 = scmp.ne.s32.totalorder %s272, %s288
      %p290 = scmp.eq.s32.totalorder %s34, 0
      %p291 = por %p289, %p290
      %p292 = scmp.le.s32.totalorder 1, %s28
      %p293 = scmp.lt.s32.totalorder %s28, 3
      %p294 = pnand %p292, %p293
      %p295 = pneg %p294
      // Predicated region
      $region9: #{tpu_custom_call.1} parent=5 // pred_check
        _
      $region10: #{tpu_custom_call.1} parent=5 // pred_check_branch
        %297 = sbr.rel (%p294) target = $region12
      $region11: #{tpu_custom_call.1} parent=5 // pred_region
        %s298 = ssub.s32 %s28, 1
        // Predicated region
        $region13: #{tpu_custom_call.1} parent=11 // pred_check
          %p299 = pneg %p75
        $region14: #{tpu_custom_call.1} parent=11 // pred_check_branch
          %301 = sbr.rel (%p299) target = $region16
        $region15: #{tpu_custom_call.1} parent=11 // pred_region
          %s303 = ssub.s32 256, 256
          %304 = vsyncadd [#allocation6], %s303
          %s305 = sshll.u32 [#allocation5], 4
          %s306 = int_to_ptr.vmem [resolvable:$true] %s305
          %311 = dma.hbm_to_vmem [thread:$0]  %s1, 256, %s306, [#allocation6], 64, 64, 4
        $region16: #{tpu_custom_call.1} parent=11 // pred_fallthru
          _
        // Predicated region
        $region17: #{tpu_custom_call.1} parent=11 // pred_check
          %p312 = pneg %p96
        $region18: #{tpu_custom_call.1} parent=11 // pred_check_branch
          %314 = sbr.rel (%p312) target = $region20
        $region19: #{tpu_custom_call.1} parent=11 // pred_region
          %s316 = ssub.s32 16, 16
          %317 = vsyncadd [#allocation6], %s316
          %s319 = sshll.u32 [#allocation7], 4
          %s320 = int_to_ptr.vmem [resolvable:$true] %s319
          %322 = dma.hbm_to_vmem [thread:$0]  %s2, 16, %s320, [#allocation6]
        $region20: #{tpu_custom_call.1} parent=11 // pred_fallthru
          _
        // Predicated region
        $region21: #{tpu_custom_call.1} parent=11 // pred_check
          %p323 = pneg %p117
        $region22: #{tpu_custom_call.1} parent=11 // pred_check_branch
          %325 = sbr.rel (%p323) target = $region24
        $region23: #{tpu_custom_call.1} parent=11 // pred_region
          %s327 = ssub.s32 256, 256
          %328 = vsyncadd [#allocation9], %s327
          %s329 = sshll.u32 [#allocation8], 4
          %s330 = int_to_ptr.vmem [resolvable:$true] %s329
          %335 = dma.hbm_to_vmem [thread:$0]  %s3, 256, %s330, [#allocation9], 64, 64, 4
        $region24: #{tpu_custom_call.1} parent=11 // pred_fallthru
          _
        // Predicated region
        $region25: #{tpu_custom_call.1} parent=11 // pred_check
          %p336 = pneg %p138
        $region26: #{tpu_custom_call.1} parent=11 // pred_check_branch
          %338 = sbr.rel (%p336) target = $region28
        $region27: #{tpu_custom_call.1} parent=11 // pred_region
          %s340 = ssub.s32 16, 16
          %341 = vsyncadd [#allocation9], %s340
          %s343 = sshll.u32 [#allocation10], 4
          %s344 = int_to_ptr.vmem [resolvable:$true] %s343
          %346 = dma.hbm_to_vmem [thread:$0]  %s4, 16, %s344, [#allocation9]
        $region28: #{tpu_custom_call.1} parent=11 // pred_fallthru
          _
        // Predicated region
        $region29: #{tpu_custom_call.1} parent=11 // pred_check
          %p347 = pneg %p159
        $region30: #{tpu_custom_call.1} parent=11 // pred_check_branch
          %349 = sbr.rel (%p347) target = $region32
        $region31: #{tpu_custom_call.1} parent=11 // pred_region
          %s351 = ssub.s32 512, 512
          %352 = vsyncadd [#allocation12], %s351
          %s353 = sshll.u32 [#allocation11], 4
          %s354 = int_to_ptr.vmem [resolvable:$true] %s353
          %359 = dma.hbm_to_vmem [thread:$0]  %s5, 512, %s354, [#allocation12], 128, 128, 8
        $region32: #{tpu_custom_call.1} parent=11 // pred_fallthru
          _
        // Predicated region
        $region33: #{tpu_custom_call.1} parent=11 // pred_check
          %p360 = pneg %p180
        $region34: #{tpu_custom_call.1} parent=11 // pred_check_branch
          %362 = sbr.rel (%p360) target = $region36
        $region35: #{tpu_custom_call.1} parent=11 // pred_region
          %s364 = ssub.s32 32, 32
          %365 = vsyncadd [#allocation12], %s364
          %s367 = sshll.u32 [#allocation13], 4
          %s368 = int_to_ptr.vmem [resolvable:$true] %s367
          %370 = dma.hbm_to_vmem [thread:$0]  %s6, 32, %s368, [#allocation12]
        $region36: #{tpu_custom_call.1} parent=11 // pred_fallthru
          _
      $region12: #{tpu_custom_call.1} parent=5 // pred_fallthru
        _
      %p371 = scmp.lt.s32.totalorder %s28, 2
      // Predicated region
      $region37: #{tpu_custom_call.1} parent=5 // pred_check
        %p372 = pneg %p371
      $region38: #{tpu_custom_call.1} parent=5 // pred_check_branch
        %374 = sbr.rel (%p372) target = $region40
      $region39: #{tpu_custom_call.1} parent=5 // pred_region
        // Predicated region
        $region41: #{tpu_custom_call.1} parent=39 // pred_check
          %p375 = pneg %p48
        $region42: #{tpu_custom_call.1} parent=39 // pred_check_branch
          %377 = sbr.rel (%p375) target = $region44
        $region43: #{tpu_custom_call.1} parent=39 // pred_region
          %s378 = sand.u32 %s38, 1
          %s379 = scalar_lea.sflag [#allocation3], %s378
          %s380 = sand.u32 %s38, 1
          %s381 = smul.addr %s380, 4
          %s382 = scalar_lea.vmem [#allocation2], %s381
          %s384 = ssub.s32 64, 64
          %385 = vsyncadd %s379, %s384
          %s386 = smul.addr %s28, 64
          %s387 = scalar_lea.hbm %s0, %s386
          %s389 = sshll.u32 %s382, 4
          %s390 = int_to_ptr.vmem [resolvable:$true] %s389
          %392 = dma.hbm_to_vmem [thread:$0]  %s387, 64, %s390, %s379
        $region44: #{tpu_custom_call.1} parent=39 // pred_fallthru
          _
        // Predicated region
        $region45: #{tpu_custom_call.1} parent=39 // pred_check
          %p393 = pneg %p200
        $region46: #{tpu_custom_call.1} parent=39 // pred_check_branch
          %395 = sbr.rel (%p393) target = $region48
        $region47: #{tpu_custom_call.1} parent=39 // pred_region
          %s396 = sand.u32 %s28, 1
          %s397 = scalar_lea.sflag [#allocation15], %s396
          %s398 = sand.u32 %s190, 1
          %s399 = smul.addr %s398, 4
          %s400 = scalar_lea.vmem [#allocation14], %s399
          %s402 = ssub.s32 64, 64
          %403 = vsyncadd %s397, %s402
          %s404 = smul.addr %s28, 64
          %s405 = scalar_lea.hbm %s7, %s404
          %s407 = sshll.u32 %s400, 4
          %s408 = int_to_ptr.vmem [resolvable:$true] %s407
          %410 = dma.hbm_to_vmem [thread:$0]  %s405, 64, %s408, %s397
        $region48: #{tpu_custom_call.1} parent=39 // pred_fallthru
          _
        // Predicated region
        $region49: #{tpu_custom_call.1} parent=39 // pred_check
          %p411 = pneg %p226
        $region50: #{tpu_custom_call.1} parent=39 // pred_check_branch
          %413 = sbr.rel (%p411) target = $region52
        $region51: #{tpu_custom_call.1} parent=39 // pred_region
          %s414 = sand.u32 %s28, 1
          %s415 = scalar_lea.sflag [#allocation15], %s414
          %s416 = sand.u32 %s216, 1
          %s417 = smul.addr %s416, 4
          %s418 = scalar_lea.vmem [#allocation16], %s417
          %s420 = ssub.s32 64, 64
          %421 = vsyncadd %s415, %s420
          %s422 = smul.addr %s28, 64
          %s423 = scalar_lea.hbm %s8, %s422
          %s425 = sshll.u32 %s418, 4
          %s426 = int_to_ptr.vmem [resolvable:$true] %s425
          %428 = dma.hbm_to_vmem [thread:$0]  %s423, 64, %s426, %s415
        $region52: #{tpu_custom_call.1} parent=39 // pred_fallthru
          _
        // Predicated region
        $region53: #{tpu_custom_call.1} parent=39 // pred_check
          %p429 = pneg %p252
        $region54: #{tpu_custom_call.1} parent=39 // pred_check_branch
          %431 = sbr.rel (%p429) target = $region56
        $region55: #{tpu_custom_call.1} parent=39 // pred_region
          %p432 = scmp.lt.s32.totalorder %s28, 1
          %s433 = scalar_select %p432, %s28, 1
          %s434 = smul.addr %s433, 8
          %s435 = scalar_lea.vmem %s9, %s434
        $region56: #{tpu_custom_call.1} parent=39 // pred_fallthru
          _
      $region40: #{tpu_custom_call.1} parent=5 // pred_fallthru
        _
      %p436 = scmp.le.s32.totalorder 1, %s28
      %p437 = scmp.lt.s32.totalorder %s28, 3
      %p438 = pnand %p436, %p437
      %p439 = pneg %p438
      // Predicated region
      $region57: #{tpu_custom_call.1} parent=5 // pred_check
        _
      $region58: #{tpu_custom_call.1} parent=5 // pred_check_branch
        %441 = sbr.rel (%p438) target = $region60
      $region59: #{tpu_custom_call.1} parent=5 // pred_region
        %s442 = ssub.s32 %s28, 1
        %s443 = sand.u32 %s41, 1
        %s444 = scalar_lea.sflag [#allocation3], %s443
        %s445 = sand.u32 %s41, 1
        %s446 = smul.addr %s445, 4
        %s447 = scalar_lea.vmem [#allocation2], %s446
        // Predicated region
        $region61: #{tpu_custom_call.1} parent=59 // pred_check
          %p448 = pneg %p54
        $region62: #{tpu_custom_call.1} parent=59 // pred_check_branch
          %450 = sbr.rel (%p448) target = $region64
        $region63: #{tpu_custom_call.1} parent=59 // pred_region
          %451 = dma.done %s444, 64
        $region64: #{tpu_custom_call.1} parent=59 // pred_fallthru
          _
        // Predicated region
        $region65: #{tpu_custom_call.1} parent=59 // pred_check
          %p452 = pneg %p75
        $region66: #{tpu_custom_call.1} parent=59 // pred_check_branch
          %454 = sbr.rel (%p452) target = $region68
        $region67: #{tpu_custom_call.1} parent=59 // pred_region
          %455 = dma.done [#allocation6], 256
        $region68: #{tpu_custom_call.1} parent=59 // pred_fallthru
          _
        // Predicated region
        $region69: #{tpu_custom_call.1} parent=59 // pred_check
          %p456 = pneg %p96
        $region70: #{tpu_custom_call.1} parent=59 // pred_check_branch
          %458 = sbr.rel (%p456) target = $region72
        $region71: #{tpu_custom_call.1} parent=59 // pred_region
          %459 = dma.done [#allocation6], 16
        $region72: #{tpu_custom_call.1} parent=59 // pred_fallthru
          _
        // Predicated region
        $region73: #{tpu_custom_call.1} parent=59 // pred_check
          %p460 = pneg %p117
        $region74: #{tpu_custom_call.1} parent=59 // pred_check_branch
          %462 = sbr.rel (%p460) target = $region76
        $region75: #{tpu_custom_call.1} parent=59 // pred_region
          %463 = dma.done [#allocation9], 256
        $region76: #{tpu_custom_call.1} parent=59 // pred_fallthru
          _
        // Predicated region
        $region77: #{tpu_custom_call.1} parent=59 // pred_check
          %p464 = pneg %p138
        $region78: #{tpu_custom_call.1} parent=59 // pred_check_branch
          %466 = sbr.rel (%p464) target = $region80
        $region79: #{tpu_custom_call.1} parent=59 // pred_region
          %467 = dma.done [#allocation9], 16
        $region80: #{tpu_custom_call.1} parent=59 // pred_fallthru
          _
        // Predicated region
        $region81: #{tpu_custom_call.1} parent=59 // pred_check
          %p468 = pneg %p159
        $region82: #{tpu_custom_call.1} parent=59 // pred_check_branch
          %470 = sbr.rel (%p468) target = $region84
        $region83: #{tpu_custom_call.1} parent=59 // pred_region
          %471 = dma.done [#allocation12], 512
        $region84: #{tpu_custom_call.1} parent=59 // pred_fallthru
          _
        // Predicated region
        $region85: #{tpu_custom_call.1} parent=59 // pred_check
          %p472 = pneg %p180
        $region86: #{tpu_custom_call.1} parent=59 // pred_check_branch
          %474 = sbr.rel (%p472) target = $region88
        $region87: #{tpu_custom_call.1} parent=59 // pred_region
          %475 = dma.done [#allocation12], 32
        $region88: #{tpu_custom_call.1} parent=59 // pred_fallthru
          _
        %s476 = sand.u32 %s33, 1
        %s477 = scalar_lea.sflag [#allocation15], %s476
        %s478 = sand.u32 %s193, 1
        %s479 = smul.addr %s478, 4
        %s480 = scalar_lea.vmem [#allocation14], %s479
        // Predicated region
        $region89: #{tpu_custom_call.1} parent=59 // pred_check
          %p481 = pneg %p206
        $region90: #{tpu_custom_call.1} parent=59 // pred_check_branch
          %483 = sbr.rel (%p481) target = $region92
        $region91: #{tpu_custom_call.1} parent=59 // pred_region
          %484 = dma.done %s477, 64
        $region92: #{tpu_custom_call.1} parent=59 // pred_fallthru
          _
        %s485 = sand.u32 %s33, 1
        %s486 = scalar_lea.sflag [#allocation15], %s485
        %s487 = sand.u32 %s219, 1
        %s488 = smul.addr %s487, 4
        %s489 = scalar_lea.vmem [#allocation16], %s488
        // Predicated region
        $region93: #{tpu_custom_call.1} parent=59 // pred_check
          %p490 = pneg %p232
        $region94: #{tpu_custom_call.1} parent=59 // pred_check_branch
          %492 = sbr.rel (%p490) target = $region96
        $region95: #{tpu_custom_call.1} parent=59 // pred_region
          %493 = dma.done %s486, 64
        $region96: #{tpu_custom_call.1} parent=59 // pred_fallthru
          _
        %s494 = sand.u32 %s41, 1
        %s495 = scalar_lea.sflag [#allocation3], %s494
        %s496 = sand.u32 %s41, 1
        %s497 = smul.addr %s496, 4
        %s498 = scalar_lea.vmem [#allocation2], %s497
        %p499 = pneg %p54
        %p500 = pneg %p51
        %p501 = pneg %p75
        %p502 = pneg %p72
        %p503 = pneg %p96
        %p504 = pneg %p93
        %p505 = pneg %p117
        %p506 = pneg %p114
        %p507 = pneg %p138
        %p508 = pneg %p135
        %p509 = pneg %p159
        %p510 = pneg %p156
        %p511 = pneg %p180
        %p512 = pneg %p177
        %s513 = sand.u32 %s33, 1
        %s514 = scalar_lea.sflag [#allocation15], %s513
        %s515 = sand.u32 %s193, 1
        %s516 = smul.addr %s515, 4
        %s517 = scalar_lea.vmem [#allocation14], %s516
        %p518 = pneg %p206
        %p519 = pneg %p203
        %s520 = sand.u32 %s33, 1
        %s521 = scalar_lea.sflag [#allocation15], %s520
        %s522 = sand.u32 %s219, 1
        %s523 = smul.addr %s522, 4
        %s524 = scalar_lea.vmem [#allocation16], %s523
        %p525 = pneg %p232
        %p526 = pneg %p229
        %p527 = scmp.lt.s32.totalorder %s33, 1
        %s528 = scalar_select %p527, %s33, 1
        %s529 = smul.addr %s528, 8
        %s530 = scalar_lea.vmem %s9, %s529
        %p531 = pneg %p258
        %p532 = pneg %p255
        %p533 = pneg %p284
        %p534 = pneg %p281
        %s535 = sand.u32 %s271, 1
        %s536 = scalar_lea.sflag [#allocation4], %s535
        %s537 = sand.u32 %s271, 1
        %s538 = smul.addr %s537, 24
        %s539 = scalar_lea.vmem [#allocation17], %s538
        %p540 = scmp.lt.s32.totalorder %s33, 1
        %s541 = scalar_select %p540, %s33, 1
        %s542 = smul.addr %s541, 8
        %s543 = scalar_lea.vmem %s9, %s542
        %v545 = vld [vmem:[%s447] sm:$0xf]
        %v546 = vld [vmem:[#allocation5] sm:$0xf]
        %v547 = vld [vmem:[#allocation5 + $0x4] sm:$0xf]
        %v548 = vld [vmem:[#allocation5 + $0x8] sm:$0xf]
        %v549 = vld [vmem:[#allocation5 + $0xc] sm:$0xf]
        %v550 = vld [vmem:[#allocation7] sm:$0x1]
        %v552 = vlaneseq
        %v553 = vshrl.u32 %v552, 7
        %v554 = vsub.s32 0, %v553
        %v555 = vrot.slane %v550, %v554
        %v561 = vunpack.c.l.b16 %v546
        %v562 = vunpack.c.l.b16 %v547
        %v563 = vunpack.c.l.b16 %v548
        %v564 = vunpack.c.l.b16 %v549
        %v565 = vpack.c.b16 %v562, %v561
        %v566 = vpack.c.b16 %v564, %v563
        %vm569 = vcmask 261120
        %v571 = vsel %vm569, %v545, 0
        %573 = vmatprep.subr.bf16.mxu0 0
        %574 = vmatpush1.bf16.msra.mxu0 0
        %575 = vmatprep.subr.bf16.mxu0 0
        %576 = vmatpush1.bf16.msra.mxu0 0
        %577 = vmatprep.subr.bf16.mxu0 0
        %578 = vmatpush1.bf16.msra.mxu0 0
        %579 = vmatprep.subr.bf16.mxu0 0
        %580 = vmatpush1.bf16.msra.mxu0 0
        %581 = vmatprep.subr.bf16.mxu0 0
        %582 = vmatpush1.bf16.msra.mxu0 0
        %583 = vmatprep.subr.bf16.mxu0 0
        %584 = vmatpush1.bf16.msra.mxu0 0
        %585 = vmatprep.subr.bf16.mxu0 0
        %586 = vmatpush1.bf16.msra.mxu0 %v566
        %587 = vmatprep.subr.bf16.mxu0 0
        %588 = vmatpush1.bf16.msra.mxu0 %v565
        %589 = vmatprep.subr.bf16.mxu0 0
        %590 = vmatpush2.bf16.msra.mxu0 0
        %591 = vmatprep.subr.bf16.mxu0 0
        %592 = vmatpush2.bf16.msra.mxu0 0
        %593 = vmatprep.subr.bf16.mxu0 0
        %594 = vmatpush2.bf16.msra.mxu0 0
        %595 = vmatprep.subr.bf16.mxu0 0
        %596 = vmatpush2.bf16.msra.mxu0 0
        %597 = vmatprep.subr.bf16.mxu0 0
        %598 = vmatpush2.bf16.msra.mxu0 0
        %599 = vmatprep.subr.bf16.mxu0 0
        %600 = vmatpush2.bf16.msra.mxu0 0
        %601 = vmatprep.subr.bf16.mxu0 0
        %602 = vmatpush2.bf16.msra.mxu0 0
        %603 = vmatprep.subr.bf16.mxu0 0
        %604 = vmatpush2.bf16.msra.mxu0 0
        %605 = vmatprep.mubr.bf16.mxu0 0
        %606 = vmatmul.mubr.bf16.gmra.mxu0 %v571
        %v607 = vpop.f32.mrf.mxu0
        %v608 = vadd.f32 %v555, %v607
        %v609 = vpop.f32.mrf.mxu0
        %v610 = vpop.f32.mrf.mxu0
        %v611 = vpop.f32.mrf.mxu0
        %612 = vdwg.mxu0
        %v613 = vmax.f32 %v608, 0.0
        %v614 = vld [vmem:[%s480] sm:$0xf]
        %v615 = vunpack.c.l.bf16 %v614
        %v616 = vmul.f32 %v613, %v615
        %v617 = vpack.c.bf16 %v616, %v616
        %v618 = vld [vmem:[#allocation8] sm:$0xf]
        %v619 = vld [vmem:[#allocation8 + $0x4] sm:$0xf]
        %v620 = vld [vmem:[#allocation8 + $0x8] sm:$0xf]
        %v621 = vld [vmem:[#allocation8 + $0xc] sm:$0xf]
        %v622 = vld [vmem:[#allocation10] sm:$0x1]
        %v624 = vlaneseq
        %v625 = vshrl.u32 %v624, 7
        %v626 = vsub.s32 0, %v625
        %v627 = vrot.slane %v622, %v626
        %v633 = vunpack.c.l.b16 %v618
        %v634 = vunpack.c.l.b16 %v619
        %v635 = vunpack.c.l.b16 %v620
        %v636 = vunpack.c.l.b16 %v621
        %v637 = vpack.c.b16 %v634, %v633
        %v638 = vpack.c.b16 %v636, %v635
        %v642 = vsel %vm569, %v617, 0
        %644 = vmatprep.subr.bf16.mxu0 0
        %645 = vmatpush1.bf16.msra.mxu0 0
        %646 = vmatprep.subr.bf16.mxu0 0
        %647 = vmatpush1.bf16.msra.mxu0 0
        %648 = vmatprep.subr.bf16.mxu0 0
        %649 = vmatpush1.bf16.msra.mxu0 0
        %650 = vmatprep.subr.bf16.mxu0 0
        %651 = vmatpush1.bf16.msra.mxu0 0
        %652 = vmatprep.subr.bf16.mxu0 0
        %653 = vmatpush1.bf16.msra.mxu0 0
        %654 = vmatprep.subr.bf16.mxu0 0
        %655 = vmatpush1.bf16.msra.mxu0 0
        %656 = vmatprep.subr.bf16.mxu0 0
        %657 = vmatpush1.bf16.msra.mxu0 %v638
        %658 = vmatprep.subr.bf16.mxu0 0
        %659 = vmatpush1.bf16.msra.mxu0 %v637
        %660 = vmatprep.subr.bf16.mxu0 0
        %661 = vmatpush2.bf16.msra.mxu0 0
        %662 = vmatprep.subr.bf16.mxu0 0
        %663 = vmatpush2.bf16.msra.mxu0 0
        %664 = vmatprep.subr.bf16.mxu0 0
        %665 = vmatpush2.bf16.msra.mxu0 0
        %666 = vmatprep.subr.bf16.mxu0 0
        %667 = vmatpush2.bf16.msra.mxu0 0
        %668 = vmatprep.subr.bf16.mxu0 0
        %669 = vmatpush2.bf16.msra.mxu0 0
        %670 = vmatprep.subr.bf16.mxu0 0
        %671 = vmatpush2.bf16.msra.mxu0 0
        %672 = vmatprep.subr.bf16.mxu0 0
        %673 = vmatpush2.bf16.msra.mxu0 0
        %674 = vmatprep.subr.bf16.mxu0 0
        %675 = vmatpush2.bf16.msra.mxu0 0
        %676 = vmatprep.mubr.bf16.mxu0 0
        %677 = vmatmul.mubr.bf16.gmra.mxu0 %v642
        %v678 = vpop.f32.mrf.mxu0
        %v679 = vadd.f32 %v627, %v678
        %v680 = vpop.f32.mrf.mxu0
        %v681 = vpop.f32.mrf.mxu0
        %v682 = vpop.f32.mrf.mxu0
        %683 = vdwg.mxu0
        %v684 = vmax.f32 %v679, 0.0
        %v685 = vld [vmem:[%s489] sm:$0xf]
        %v686 = vunpack.c.l.bf16 %v685
        %v687 = vmul.f32 %v684, %v686
        %v688 = vpack.c.bf16 %v687, %v687
        %v689 = vld [vmem:[#allocation11] sm:$0xff]
        %v690 = vld [vmem:[#allocation11 + $0x8] sm:$0xff]
        %v691 = vld [vmem:[#allocation11 + $0x10] sm:$0xff]
        %v692 = vld [vmem:[#allocation11 + $0x18] sm:$0xff]
        %v693 = vld [vmem:[#allocation13] sm:$0x3]
        %v695 = vlaneseq
        %v696 = vshrl.u32 %v695, 7
        %v697 = vsub.s32 0, %v696
        %v698 = vrot.slane %v693, %v697
        %v699 = vlaneseq
        %v700 = vshrl.u32 %v699, 7
        %v701 = vsub.s32 1, %v700
        %v702 = vrot.slane %v693, %v701
        %v709 = vunpack.c.l.b16 %v689
        %v710 = vunpack.c.h.b16 %v689
        %v711 = vunpack.c.l.b16 %v690
        %v712 = vunpack.c.h.b16 %v690
        %v713 = vunpack.c.l.b16 %v691
        %v714 = vunpack.c.h.b16 %v691
        %v715 = vunpack.c.l.b16 %v692
        %v716 = vunpack.c.h.b16 %v692
        %v717 = vpack.c.b16 %v711, %v709
        %v718 = vpack.c.b16 %v712, %v710
        %v719 = vpack.c.b16 %v715, %v713
        %v720 = vpack.c.b16 %v716, %v714
        %v726 = vsel %vm569, %v688, 0
        %728 = vmatprep.subr.bf16.mxu0 0
        %729 = vmatpush1.bf16.msra.mxu0 0
        %730 = vmatprep.subr.bf16.mxu0 0
        %731 = vmatpush1.bf16.msra.mxu0 0
        %732 = vmatprep.subr.bf16.mxu0 0
        %733 = vmatpush1.bf16.msra.mxu0 0
        %734 = vmatprep.subr.bf16.mxu0 0
        %735 = vmatpush1.bf16.msra.mxu0 0
        %736 = vmatprep.subr.bf16.mxu0 0
        %737 = vmatpush1.bf16.msra.mxu0 0
        %738 = vmatprep.subr.bf16.mxu0 0
        %739 = vmatpush1.bf16.msra.mxu0 0
        %740 = vmatprep.subr.bf16.mxu0 %v720
        %741 = vmatpush1.bf16.msra.mxu0 %v719
        %742 = vmatprep.subr.bf16.mxu0 %v718
        %743 = vmatpush1.bf16.msra.mxu0 %v717
        %744 = vmatprep.subr.bf16.mxu0 0
        %745 = vmatpush2.bf16.msra.mxu0 0
        %746 = vmatprep.subr.bf16.mxu0 0
        %747 = vmatpush2.bf16.msra.mxu0 0
        %748 = vmatprep.subr.bf16.mxu0 0
        %749 = vmatpush2.bf16.msra.mxu0 0
        %750 = vmatprep.subr.bf16.mxu0 0
        %751 = vmatpush2.bf16.msra.mxu0 0
        %752 = vmatprep.subr.bf16.mxu0 0
        %753 = vmatpush2.bf16.msra.mxu0 0
        %754 = vmatprep.subr.bf16.mxu0 0
        %755 = vmatpush2.bf16.msra.mxu0 0
        %756 = vmatprep.subr.bf16.mxu0 0
        %757 = vmatpush2.bf16.msra.mxu0 0
        %758 = vmatprep.subr.bf16.mxu0 0
        %759 = vmatpush2.bf16.msra.mxu0 0
        %760 = vmatprep.mubr.bf16.mxu0 0
        %761 = vmatmul.mubr.bf16.gmra.mxu0 %v726
        %v762 = vpop.f32.mrf.mxu0
        %v763 = vadd.f32 %v698, %v762
        %v764 = vpop.f32.mrf.mxu0
        %v765 = vadd.f32 %v702, %v764
        %v766 = vpop.f32.mrf.mxu0
        %v767 = vpop.f32.mrf.mxu0
        %768 = vdwg.mxu0
        %v769 = vmax.f32 %v763, 0.0
        %v770 = vmax.f32 %v765, 0.0
        %771 = vst [vmem:[%s539] sm:$0xff] %v769
        %772 = vst [vmem:[%s539 + $0x8] sm:$0xff] %v770
        %v773 = vld [vmem:[%s543] sm:$0xff]
        %v774 = vmul.f32 %v770, 0.5
        %v775 = vmul.f32 %v774, 1.442695
        %v776 = vpow.pop %v775
        %v777 = vmul.f32 %v773, %v776
        %v778 = vadd.f32 %v769, %v777
        %779 = vst [vmem:[%s539 + $0x10] sm:$0xff] %v778
        %s780 = sand.u32 %s271, 1
        %s781 = scalar_lea.sflag [#allocation4], %s780
        %s782 = sand.u32 %s271, 1
        %s783 = smul.addr %s782, 24
        %s784 = scalar_lea.vmem [#allocation17], %s783
        // Predicated region
        $region97: #{tpu_custom_call.1} parent=59 // pred_check
          %p785 = pneg %p281
        $region98: #{tpu_custom_call.1} parent=59 // pred_check_branch
          %787 = sbr.rel (%p785) target = $region100
        $region99: #{tpu_custom_call.1} parent=59 // pred_region
          %s789 = ssub.s32 384, 384
          %790 = vsyncadd %s781, %s789
          %s791 = smul.addr %s33, 3
          %s792 = smul.addr %s791, 128
          %s793 = scalar_lea.hbm %s10, %s792
          %s795 = sshll.u32 %s784, 4
          %s796 = int_to_ptr.vmem [resolvable:$true] %s795
          %798 = dma.vmem_to_hbm [thread:$0]  %s796, 384, %s793, %s781
        $region100: #{tpu_custom_call.1} parent=59 // pred_fallthru
          _
      $region60: #{tpu_custom_call.1} parent=5 // pred_fallthru
        _
      %p799 = scmp.le.s32.totalorder 2, %s28
      // Predicated region
      $region101: #{tpu_custom_call.1} parent=5 // pred_check
        %p800 = pneg %p799
      $region102: #{tpu_custom_call.1} parent=5 // pred_check_branch
        %802 = sbr.rel (%p800) target = $region104
      $region103: #{tpu_custom_call.1} parent=5 // pred_region
        %s803 = ssub.s32 %s28, 2
        // Predicated region
        $region105: #{tpu_custom_call.1} parent=103 // pred_check
          %p804 = pneg %p287
        $region106: #{tpu_custom_call.1} parent=103 // pred_check_branch
          %806 = sbr.rel (%p804) target = $region108
        $region107: #{tpu_custom_call.1} parent=103 // pred_region
          %s807 = sand.u32 %s272, 1
          %s808 = scalar_lea.sflag [#allocation4], %s807
          %s809 = sand.u32 %s272, 1
          %s810 = smul.addr %s809, 24
          %s811 = scalar_lea.vmem [#allocation17], %s810
          %812 = dma.done %s808, 384
        $region108: #{tpu_custom_call.1} parent=103 // pred_fallthru
          _
      $region104: #{tpu_custom_call.1} parent=5 // pred_fallthru
        _
    $region6: #{tpu_custom_call.1} parent=1 // loop_footer
      %s32 = sadd.s32 1, %s28
    $region7: #{tpu_custom_call.1} parent=1 // loop_footer_branch
      %27 = sbr.rel target = $region3
    $region8: #{tpu_custom_call.1} parent=1 // loop_exit
      _
    %813 = vsyncpa [#allocation3], 1
    %s814 = scalar_lea.sflag [#allocation3], 1
    %815 = vsyncpa %s814, 1
    %816 = vsyncpa [#allocation6], 1
    %817 = vsyncpa [#allocation9], 1
    %818 = vsyncpa [#allocation12], 1
    %819 = vsyncpa [#allocation15], 1
    %s820 = scalar_lea.sflag [#allocation15], 1
    %821 = vsyncpa %s820, 1
    %822 = vsyncpa [#allocation4], 1
    %s823 = scalar_lea.sflag [#allocation4], 1
    %824 = vsyncpa %s823, 1

</llo_original>
